<compile_context>
chip_gen: v7x
topology: tpu7x:2x2x1
jax: 0.10.0
libtpu: 0.0.40
codegen_flags: <defaults>
</compile_context>

<pallas_src>
import functools

import jax
import jax.numpy as jnp
from jax import lax
from jax.experimental import pallas as pl
from jax.experimental.pallas import tpu as pltpu

LANES = 128
MAX_BLOCK_ROWS = 8192      # (8192, 128) f32 = 4 MiB per input per grid step
STRIP_ROWS = 512           # inner accumulation strip (keeps per-iteration temporaries small)


def _tpu_generation():
    """Best-effort TPU generation from device_kind; 0 if unknown."""
    try:
        kind = jax.devices()[0].device_kind.lower()
    except Exception:
        return 0
    for g in (7, 6, 5, 4, 3):
        if f"v{g}" in kind:
            return g
    return 0


def _combined_loss_kernel(pred_ref, target_ref, out_ref, *,
                          block_rows, strip_rows, n_strips,
                          chunks_per_part, total_rows, needs_mask):
    p = pl.program_id(0)
    j = pl.program_id(1)

    @pl.when(j == 0)
    def _():
        out_ref[...] = jnp.zeros_like(out_ref)

    def accumulate(masked, rows_left):
        # `masked` is a static Python bool; `rows_left` is a traced scalar (only used if masked).
        if masked:
            rid = lax.broadcasted_iota(jnp.int32, (strip_rows, LANES), 0)

        def strip_stats(s, carry):
            acc_bce, acc_inter, acc_psum = carry
            r = s * strip_rows
            if not isinstance(r, int) and strip_rows % 8 == 0:
                r = pl.multiple_of(r, 8)
            x = pred_ref[pl.ds(r, strip_rows), :].astype(jnp.float32)
            t = target_ref[pl.ds(r, strip_rows), :].astype(jnp.float32)
            if masked:
                valid = rid < (rows_left - r)
                # Zero BEFORE the logs: rows beyond the real array hold garbage (NaN/Inf-safe).
                x = jnp.where(valid, x, 0.0)
                t = jnp.where(valid, t, 0.0)
            # PyTorch BCELoss clamps log outputs at -100 for numerical stability.
            log_x = jnp.maximum(jnp.log(x), -100.0)
            log_1mx = jnp.maximum(jnp.log(1.0 - x), -100.0)
            # BCE_elem = -(t*log x + (1-t)*log(1-x)) = -(t*(log x - log(1-x)) + log(1-x))
            neg_bce = t * (log_x - log_1mx) + log_1mx
            return (acc_bce + jnp.sum(neg_bce, axis=0, keepdims=True),
                    acc_inter + jnp.sum(x * t, axis=0, keepdims=True),
                    acc_psum + jnp.sum(x + t, axis=0, keepdims=True))

        init = (jnp.zeros((1, LANES), jnp.float32),
                jnp.zeros((1, LANES), jnp.float32),
                jnp.zeros((1, LANES), jnp.float32))
        if n_strips == 1:
            acc_bce, acc_inter, acc_psum = strip_stats(0, init)
        else:
            acc_bce, acc_inter, acc_psum = lax.fori_loop(
                0, n_strips, strip_stats, init, unroll=True)

        # One resident-output update per grid step (per-strip partials stay in vregs).
        out_ref[0, 0] += acc_bce
        out_ref[0, 1] += acc_inter
        out_ref[0, 2] += acc_psum

    if not needs_mask:
        accumulate(False, None)
    else:
        chunk = p * chunks_per_part + j
        rows_left = total_rows - chunk * block_rows   # may be <= 0 on overflow steps
        is_full = rows_left >= block_rows

        @pl.when(is_full)
        def _():
            accumulate(False, None)          # interior chunks: no per-element mask cost

        @pl.when(jnp.logical_not(is_full))
        def _():
            accumulate(True, rows_left)      # ragged / overflow chunks only


@functools.partial(jax.jit, static_argnames=("max_block_rows", "num_partitions"))
def combined_loss(pred, target, alpha=0.7, smooth=1e-6, *,
                  max_block_rows=MAX_BLOCK_ROWS, num_partitions=None):
    """alpha * BCE(pred, target) + (1 - alpha) * DiceLoss(pred, target).

    Accepts f32 or bf16 inputs (upcast happens in-kernel; accumulation is f32).
    """
    assert pred.shape == target.shape
    n_elems = pred.size

    flat_p = jnp.ravel(pred)
    flat_t = jnp.ravel(target)

    # Split off the (< 128)-element tail so the main body never needs a padded copy of the
    # full arrays.  n % 128 == 0 (the common NCHW case) takes the fully copy-free path.
    n_main = (n_elems // LANES) * LANES
    rem = n_elems - n_main

    if n_main == 0:
        sums = jnp.zeros((3,), jnp.float32)
    else:
        main_p = flat_p if rem == 0 else lax.slice(flat_p, (0,), (n_main,))
        main_t = flat_t if rem == 0 else lax.slice(flat_t, (0,), (n_main,))
        rows = n_main // LANES
        p2d = main_p.reshape(rows, LANES)
        t2d = main_t.reshape(rows, LANES)

        block_rows = rows if rows <= max_block_rows else max_block_rows
        chunks = pl.cdiv(rows, block_rows)

        if num_partitions is None:
            num_partitions = 2 if _tpu_generation() >= 7 else 1
        n_parts = num_partitions if chunks >= num_partitions else 1
        cpp = pl.cdiv(chunks, n_parts)                       # chunks per partition
        needs_mask = (n_parts * cpp * block_rows) != rows

        if block_rows % STRIP_ROWS == 0 and block_rows > STRIP_ROWS:
            strip_rows = STRIP_ROWS
            n_strips = block_rows // STRIP_ROWS
        else:
            strip_rows = block_rows
            n_strips = 1

        if n_parts * cpp == chunks:
            def in_map(pi, ji):
                return (pi * cpp + ji, 0)
        else:
            def in_map(pi, ji):
                # Clamp overflow steps onto the last real chunk; the kernel fully masks them.
                return (jnp.minimum(pi * cpp + ji, chunks - 1), 0)

        kernel = functools.partial(
            _combined_loss_kernel,
            block_rows=block_rows,
            strip_rows=strip_rows,
            n_strips=n_strips,
            chunks_per_part=cpp,
            total_rows=rows,
            needs_mask=needs_mask,
        )

        partials = pl.pallas_call(
            kernel,
            out_shape=jax.ShapeDtypeStruct((n_parts, 3, 1, LANES), jnp.float32),
            grid_spec=pltpu.PrefetchScalarGridSpec(
                num_scalar_prefetch=0,
                grid=(n_parts, cpp),
                in_specs=[
                    pl.BlockSpec((block_rows, LANES), in_map),
                    pl.BlockSpec((block_rows, LANES), in_map),
                ],
                out_specs=pl.BlockSpec((1, 3, 1, LANES), lambda pi, ji: (pi, 0, 0, 0)),
            ),
            compiler_params=pltpu.CompilerParams(
                dimension_semantics=("parallel", "arbitrary"),
                vmem_limit_bytes=32 * 1024 * 1024,
            ),
        )(p2d, t2d)

        # Tiny final combine: (n_parts, 3, 1, 128) -> 3 scalars.
        sums = jnp.sum(partials, axis=(0, 2, 3))

    if rem:
        # < 128-element tail handled in plain JAX (negligible cost).
        tail_p = lax.slice(flat_p, (n_main,), (n_elems,)).astype(jnp.float32)
        tail_t = lax.slice(flat_t, (n_main,), (n_elems,)).astype(jnp.float32)
        log_p = jnp.maximum(jnp.log(tail_p), -100.0)
        log_1mp = jnp.maximum(jnp.log(1.0 - tail_p), -100.0)
        tail_bce = jnp.sum(tail_t * (log_p - log_1mp) + log_1mp)
        tail_inter = jnp.sum(tail_p * tail_t)
        tail_psum = jnp.sum(tail_p + tail_t)
        sums = sums + jnp.stack([tail_bce, tail_inter, tail_psum])

    bce_loss = -sums[0] / n_elems
    dice = (2.0 * sums[1] + smooth) / (sums[2] + smooth)
    dice_loss = 1.0 - dice
    return alpha * bce_loss + (1.0 - alpha) * dice_loss


def _reference_loss(pred, target, alpha=0.7, smooth=1e-6):
    p = pred.astype(jnp.float32).ravel()
    t = target.astype(jnp.float32).ravel()
    log_p = jnp.maximum(jnp.log(p), -100.0)
    log_1mp = jnp.maximum(jnp.log(1.0 - p), -100.0)
    bce = jnp.mean(-(t * log_p + (1.0 - t) * log_1mp))
    inter = jnp.sum(p * t)
    dice = (2.0 * inter + smooth) / (jnp.sum(p) + jnp.sum(t) + smooth)
    return alpha * bce + (1.0 - alpha) * (1.0 - dice)


def _make_inputs(key, shape):
    k_pred, k_tgt = jax.random.split(key)
    pred = jax.nn.sigmoid(jax.random.normal(k_pred, shape, dtype=jnp.float32))
    target = (jax.random.uniform(k_tgt, shape) > 0.5).astype(jnp.float32)
    return pred, target


if __name__ == "__main__":
    key = jax.random.PRNGKey(0)

    # 1) Segmentation-style small shape: N=2, C=4, H=W=16 (divides evenly, fast path).
    pred, target = _make_inputs(key, (2, 4, 16, 16))
    loss = jax.block_until_ready(combined_loss(pred, target, alpha=0.7))
    ref = jax.block_until_ready(_reference_loss(pred, target, alpha=0.7))
    assert jnp.allclose(loss, ref, rtol=1e-5, atol=1e-5), (loss, ref)

    # 2) Force the ragged-chunk / partitioned / masked path (small block size override).
    pred2, target2 = _make_inputs(jax.random.PRNGKey(1), (2, 4, 16, 20))
    loss2 = jax.block_until_ready(
        combined_loss(pred2, target2, alpha=0.7, max_block_rows=8, num_partitions=2))
    ref2 = jax.block_until_ready(_reference_loss(pred2, target2, alpha=0.7))
    assert jnp.allclose(loss2, ref2, rtol=1e-5, atol=1e-5), (loss2, ref2)

    # 3) n % 128 != 0: exercises the plain-JAX tail epilogue (no padded copies).
    pred3, target3 = _make_inputs(jax.random.PRNGKey(2), (3, 5, 7, 11))
    loss3 = jax.block_until_ready(combined_loss(pred3, target3, alpha=0.3))
    ref3 = jax.block_until_ready(_reference_loss(pred3, target3, alpha=0.3))
    assert jnp.allclose(loss3, ref3, rtol=1e-5, atol=1e-5), (loss3, ref3)

    print("KERNEL_OK")
</pallas_src>

<mosaic_0001>
module attributes {stable_mosaic.version = 11 : i64} {
  func.func @_combined_loss_kernel(%arg0: i32, %arg1: i32, %arg2: memref<16x128xf32, #tpu.memory_space<vmem>>, %arg3: memref<16x128xf32, #tpu.memory_space<vmem>>, %arg4: memref<1x3x1x128xf32, #tpu.memory_space<vmem>>) attributes {dimension_semantics = [#tpu.dimension_semantics<parallel>, #tpu.dimension_semantics<arbitrary>], iteration_bounds = array<i64: 1, 1>, scalar_prefetch = 0 : i64, scratch_operands = 0 : i64, tpu.core_type = #tpu.core_type<tc>, window_params = [{transform_indices = @transform_0, window_bounds = array<i64: 16, 128>}, {transform_indices = @transform_1, window_bounds = array<i64: 16, 128>}, {transform_indices = @transform_2, window_bounds = array<i64: 1, 3, 1, 128>}]} {
    %c0_i32 = arith.constant 0 : i32
    %0 = arith.cmpi eq, %arg1, %c0_i32 : i32
    %1 = arith.extui %0 : i1 to i32
    %c0_i32_0 = arith.constant 0 : i32
    %2 = arith.cmpi ne, %1, %c0_i32_0 : i32
    scf.if %2 {
      %cst_34 = arith.constant 0.000000e+00 : f32
      %48 = vector.broadcast %cst_34 : f32 to vector<1x3x1x128xf32>
      %c0_35 = arith.constant 0 : index
      %c0_36 = arith.constant 0 : index
      %c0_37 = arith.constant 0 : index
      %c0_38 = arith.constant 0 : index
      %49 = vector.load %arg4[%c0_35, %c0_36, %c0_37, %c0_38] : memref<1x3x1x128xf32, #tpu.memory_space<vmem>>, vector<1x3x1x128xf32>
      tpu.vector_store %arg4[%c0_35, %c0_36, %c0_37, %c0_38], %48 {strides = array<i32>} : memref<1x3x1x128xf32, #tpu.memory_space<vmem>>, vector<1x3x1x128xf32>,
    } else {
    }
    %cst = arith.constant 0.000000e+00 : f32
    %3 = vector.broadcast %cst : f32 to vector<1x128xf32>
    %cst_1 = arith.constant 0.000000e+00 : f32
    %4 = vector.broadcast %cst_1 : f32 to vector<1x128xf32>
    %cst_2 = arith.constant 0.000000e+00 : f32
    %5 = vector.broadcast %cst_2 : f32 to vector<1x128xf32>
    %c0 = arith.constant 0 : index
    %c0_3 = arith.constant 0 : index
    %6 = vector.load %arg2[%c0, %c0_3] : memref<16x128xf32, #tpu.memory_space<vmem>>, vector<16x128xf32>
    %c0_4 = arith.constant 0 : index
    %c0_5 = arith.constant 0 : index
    %7 = vector.load %arg3[%c0_4, %c0_5] : memref<16x128xf32, #tpu.memory_space<vmem>>, vector<16x128xf32>
    %8 = math.log %6 : vector<16x128xf32>
    %cst_6 = arith.constant -1.000000e+02 : f32
    %9 = vector.broadcast %cst_6 : f32 to vector<16x128xf32>
    %10 = arith.maximumf %8, %9 : vector<16x128xf32>
    %cst_7 = arith.constant 1.000000e+00 : f32
    %11 = vector.broadcast %cst_7 : f32 to vector<16x128xf32>
    %12 = arith.subf %11, %6 : vector<16x128xf32>
    %13 = math.log %12 : vector<16x128xf32>
    %cst_8 = arith.constant -1.000000e+02 : f32
    %14 = vector.broadcast %cst_8 : f32 to vector<16x128xf32>
    %15 = arith.maximumf %13, %14 : vector<16x128xf32>
    %16 = arith.subf %10, %15 : vector<16x128xf32>
    %17 = arith.mulf %7, %16 : vector<16x128xf32>
    %18 = arith.addf %17, %15 : vector<16x128xf32>
    %cst_9 = arith.constant dense<0.000000e+00> : vector<128xf32>
    %19 = vector.multi_reduction <add>, %18, %cst_9 [0] : vector<16x128xf32> to vector<128xf32>
    %20 = vector.shape_cast %19 : vector<128xf32> to vector<1x128xf32>
    %21 = arith.addf %3, %20 : vector<1x128xf32>
    %22 = arith.mulf %6, %7 : vector<16x128xf32>
    %cst_10 = arith.constant dense<0.000000e+00> : vector<128xf32>
    %23 = vector.multi_reduction <add>, %22, %cst_10 [0] : vector<16x128xf32> to vector<128xf32>
    %24 = vector.shape_cast %23 : vector<128xf32> to vector<1x128xf32>
    %25 = arith.addf %4, %24 : vector<1x128xf32>
    %26 = arith.addf %6, %7 : vector<16x128xf32>
    %cst_11 = arith.constant dense<0.000000e+00> : vector<128xf32>
    %27 = vector.multi_reduction <add>, %26, %cst_11 [0] : vector<16x128xf32> to vector<128xf32>
    %28 = vector.shape_cast %27 : vector<128xf32> to vector<1x128xf32>
    %29 = arith.addf %5, %28 : vector<1x128xf32>
    %c0_12 = arith.constant 0 : index
    %c0_13 = arith.constant 0 : index
    %c0_14 = arith.constant 0 : index
    %c0_15 = arith.constant 0 : index
    %30 = vector.load %arg4[%c0_12, %c0_13, %c0_14, %c0_15] : memref<1x3x1x128xf32, #tpu.memory_space<vmem>>, vector<1x1x1x128xf32>
    %31 = vector.shape_cast %30 : vector<1x1x1x128xf32> to vector<1x128xf32>
    %32 = arith.addf %31, %21 : vector<1x128xf32>
    %c0_16 = arith.constant 0 : index
    %c0_17 = arith.constant 0 : index
    %c0_18 = arith.constant 0 : index
    %c0_19 = arith.constant 0 : index
    %33 = vector.load %arg4[%c0_16, %c0_17, %c0_18, %c0_19] : memref<1x3x1x128xf32, #tpu.memory_space<vmem>>, vector<1x1x1x128xf32>
    %34 = vector.shape_cast %33 : vector<1x1x1x128xf32> to vector<1x128xf32>
    %35 = vector.shape_cast %32 : vector<1x128xf32> to vector<1x1x1x128xf32>
    tpu.vector_store %arg4[%c0_16, %c0_17, %c0_18, %c0_19], %35 {strides = array<i32>} : memref<1x3x1x128xf32, #tpu.memory_space<vmem>>, vector<1x1x1x128xf32>,
    %c0_20 = arith.constant 0 : index
    %c1 = arith.constant 1 : index
    %c0_21 = arith.constant 0 : index
    %c0_22 = arith.constant 0 : index
    %36 = vector.load %arg4[%c0_20, %c1, %c0_21, %c0_22] : memref<1x3x1x128xf32, #tpu.memory_space<vmem>>, vector<1x1x1x128xf32>
    %37 = vector.shape_cast %36 : vector<1x1x1x128xf32> to vector<1x128xf32>
    %38 = arith.addf %37, %25 : vector<1x128xf32>
    %c0_23 = arith.constant 0 : index
    %c1_24 = arith.constant 1 : index
    %c0_25 = arith.constant 0 : index
    %c0_26 = arith.constant 0 : index
    %39 = vector.load %arg4[%c0_23, %c1_24, %c0_25, %c0_26] : memref<1x3x1x128xf32, #tpu.memory_space<vmem>>, vector<1x1x1x128xf32>
    %40 = vector.shape_cast %39 : vector<1x1x1x128xf32> to vector<1x128xf32>
    %41 = vector.shape_cast %38 : vector<1x128xf32> to vector<1x1x1x128xf32>
    tpu.vector_store %arg4[%c0_23, %c1_24, %c0_25, %c0_26], %41 {strides = array<i32>} : memref<1x3x1x128xf32, #tpu.memory_space<vmem>>, vector<1x1x1x128xf32>,
    %c0_27 = arith.constant 0 : index
    %c2 = arith.constant 2 : index
    %c0_28 = arith.constant 0 : index
    %c0_29 = arith.constant 0 : index
    %42 = vector.load %arg4[%c0_27, %c2, %c0_28, %c0_29] : memref<1x3x1x128xf32, #tpu.memory_space<vmem>>, vector<1x1x1x128xf32>
    %43 = vector.shape_cast %42 : vector<1x1x1x128xf32> to vector<1x128xf32>
    %44 = arith.addf %43, %29 : vector<1x128xf32>
    %c0_30 = arith.constant 0 : index
    %c2_31 = arith.constant 2 : index
    %c0_32 = arith.constant 0 : index
    %c0_33 = arith.constant 0 : index
    %45 = vector.load %arg4[%c0_30, %c2_31, %c0_32, %c0_33] : memref<1x3x1x128xf32, #tpu.memory_space<vmem>>, vector<1x1x1x128xf32>
    %46 = vector.shape_cast %45 : vector<1x1x1x128xf32> to vector<1x128xf32>
    %47 = vector.shape_cast %44 : vector<1x128xf32> to vector<1x1x1x128xf32>
    tpu.vector_store %arg4[%c0_30, %c2_31, %c0_32, %c0_33], %47 {strides = array<i32>} : memref<1x3x1x128xf32, #tpu.memory_space<vmem>>, vector<1x1x1x128xf32>,
    return
  }
  func.func @transform_0(%arg0: i32, %arg1: i32) -> (i32, i32) {
    %c1_i32 = arith.constant 1 : i32
    %0 = arith.muli %arg0, %c1_i32 : i32
    %1 = arith.addi %0, %arg1 : i32
    %c0_i32 = arith.constant 0 : i32
    %c0_i32_0 = arith.constant 0 : i32
    return %1, %c0_i32 : i32, i32
  }
  func.func @transform_1(%arg0: i32, %arg1: i32) -> (i32, i32) {
    %c1_i32 = arith.constant 1 : i32
    %0 = arith.muli %arg0, %c1_i32 : i32
    %1 = arith.addi %0, %arg1 : i32
    %c0_i32 = arith.constant 0 : i32
    %c0_i32_0 = arith.constant 0 : i32
    return %1, %c0_i32 : i32, i32
  }
  func.func @transform_2(%arg0: i32, %arg1: i32) -> (i32, i32, i32, i32) {
    %c0_i32 = arith.constant 0 : i32
    %c0_i32_0 = arith.constant 0 : i32
    %c0_i32_1 = arith.constant 0 : i32
    %c0_i32_2 = arith.constant 0 : i32
    return %arg0, %c0_i32, %c0_i32_0, %c0_i32_1 : i32, i32, i32, i32
  }
}

</mosaic_0001>

<llo_original>
// kernel: combined_loss.1
$region0: #{combined_loss.1}
  #allocation0 [shape = 'u32[]', space=smem, size = 0x4, offset = 0x4, fixed_abs, tag = 'smem constant byte address 0x4 - core index']
  #allocation1 [shape = 'u32[144,128]{1,0:T(1,128)}', space=vmem, size = 0x12000, scoped, tag = 'internal scratch']
  %s0 = inlined_call_operand.vmem [shape: f32[16,128], index: 0, kind: input, shape index: {}]
  %s1 = inlined_call_operand.vmem [shape: f32[16,128], index: 1, kind: input, shape index: {}]
  %s2 = inlined_call_operand.vmem [shape: f32[1,3,1,128], index: 2, kind: output, shape index: {}]
  %s3 = sld [smem:[#allocation0]]
  $region22: #{combined_loss.1} parent=0
    _
  %s5 = ssub.s32 1, %s3
  %s6 = scalar_select 0, %s5, %s3
  // Predicated region
  $region2: #{combined_loss.1} parent=0 // pred_check
    _
  $region3: #{combined_loss.1} parent=0 // pred_check_branch
    %8 = sbr.rel (0) target = $region5
  $region4: #{combined_loss.1} parent=0 // pred_region
    %s9 = sadd.s32 0, 0
    %s10 = smul.u32 2, %s9
    %p11 = scmp.lt.s32.totalorder %s10, 1
    %s12 = scalar_select %p11, %s10, 1
    %s13 = smul.addr %s12, 8
    %s14 = scalar_lea.vmem %s0, %s13
    %s15 = sadd.s32 0, 0
    %s16 = smul.u32 2, %s15
  $region5: #{combined_loss.1} parent=0 // pred_fallthru
    _
  // Predicated region
  $region6: #{combined_loss.1} parent=0 // pred_check
    _
  $region7: #{combined_loss.1} parent=0 // pred_check_branch
    %18 = sbr.rel (0) target = $region9
  $region8: #{combined_loss.1} parent=0 // pred_region
    %s19 = sadd.s32 0, 0
    %s20 = smul.u32 2, %s19
    %p21 = scmp.lt.s32.totalorder %s20, 1
    %s22 = scalar_select %p21, %s20, 1
    %s23 = smul.addr %s22, 8
    %s24 = scalar_lea.vmem %s1, %s23
    %s25 = sadd.s32 0, 0
    %s26 = smul.u32 2, %s25
  $region9: #{combined_loss.1} parent=0 // pred_fallthru
    _
  %s27 = sadd.s32 0, 0
  %s28 = smul.u32 2, %s27
  %p29 = scmp.lt.s32.totalorder %s28, 1
  %s30 = scalar_select %p29, %s28, 1
  %s31 = smul.addr %s30, 8
  %s32 = scalar_lea.vmem %s0, %s31
  %s33 = sadd.s32 0, 0
  %s34 = smul.u32 2, %s33
  %p35 = scmp.lt.s32.totalorder %s34, 1
  %s36 = scalar_select %p35, %s34, 1
  %s37 = smul.addr %s36, 8
  %s38 = scalar_lea.vmem %s1, %s37
  %s39 = sadd.s32 0, 0
  %s40 = smul.u32 2, %s39
  %p41 = scmp.lt.s32.totalorder %s40, 1
  %s42 = scalar_select %p41, %s40, 1
  %s43 = smul.addr %s42, 8
  %s44 = scalar_lea.vmem %s0, %s43
  %s45 = sadd.s32 0, 0
  %s46 = smul.u32 2, %s45
  %s47 = sadd.s32 0, 0
  %s48 = smul.u32 2, %s47
  %p49 = scmp.lt.s32.totalorder %s48, 1
  %s50 = scalar_select %p49, %s48, 1
  %s51 = smul.addr %s50, 8
  %s52 = scalar_lea.vmem %s1, %s51
  %s53 = sadd.s32 0, 0
  %s54 = smul.u32 2, %s53
  %p55 = scmp.eq.s32.totalorder 0, 0
  // Predicated region
  $region10: #{combined_loss.1} parent=0 // pred_check
    %p56 = pneg %p55
  $region11: #{combined_loss.1} parent=0 // pred_check_branch
    %58 = sbr.rel (%p56) target = $region13
  $region12: #{combined_loss.1} parent=0 // pred_region
    %59 = vst [vmem:[%s2] sm:$0x1] 0.0
    %60 = vst [vmem:[%s2 + $0x1] sm:$0x1] 0.0
    %61 = vst [vmem:[%s2 + $0x2] sm:$0x1] 0.0
  $region13: #{combined_loss.1} parent=0 // pred_fallthru
    _
  %v62 = vld [vmem:[%s44] sm:$0xff]
  %v63 = vld [vmem:[%s44 + $0x8] sm:$0xff]
  %v64 = vld [vmem:[%s52] sm:$0xff]
  %v65 = vld [vmem:[%s52 + $0x8] sm:$0xff]
  %v66 = vlog2.pop %v62
  %v67 = vmul.f32 %v66, 0.6931472
  %v68 = vlog2.pop %v63
  %v69 = vmul.f32 %v68, 0.6931472
  %v70 = vmax.f32 %v67, -100.0
  %v71 = vmax.f32 %v69, -100.0
  %v72 = vsub.f32 1.0, %v62
  %v73 = vsub.f32 1.0, %v63
  %v74 = vlog2.pop %v72
  %v75 = vmul.f32 %v74, 0.6931472
  %v76 = vlog2.pop %v73
  %v77 = vmul.f32 %v76, 0.6931472
  %v78 = vmax.f32 %v75, -100.0
  %v79 = vmax.f32 %v77, -100.0
  %v80 = vsub.f32 %v70, %v78
  %v81 = vsub.f32 %v71, %v79
  %v82 = vmul.f32 %v64, %v80
  %v83 = vmul.f32 %v65, %v81
  %v84 = vadd.f32 %v82, %v78
  %v85 = vadd.f32 %v83, %v79
  %v86 = vadd.f32 %v84, %v85
  %v87 = vrot.slane %v86, 4
  %v88 = vadd.f32 %v86, %v87
  %v89 = vrot.slane %v88, 2
  %v90 = vadd.f32 %v88, %v89
  %v91 = vrot.slane %v90, 1
  %v92 = vadd.f32 %v90, %v91
  %v93 = vadd.f32 %v92, 0.0
  %v94 = vmul.f32 %v62, %v64
  %v95 = vmul.f32 %v63, %v65
  %v96 = vadd.f32 %v94, %v95
  %v97 = vrot.slane %v96, 4
  %v98 = vadd.f32 %v96, %v97
  %v99 = vrot.slane %v98, 2
  %v100 = vadd.f32 %v98, %v99
  %v101 = vrot.slane %v100, 1
  %v102 = vadd.f32 %v100, %v101
  %v103 = vadd.f32 %v102, 0.0
  %v104 = vadd.f32 %v62, %v64
  %v105 = vadd.f32 %v63, %v65
  %v106 = vadd.f32 %v104, %v105
  %v107 = vrot.slane %v106, 4
  %v108 = vadd.f32 %v106, %v107
  %v109 = vrot.slane %v108, 2
  %v110 = vadd.f32 %v108, %v109
  %v111 = vrot.slane %v110, 1
  %v112 = vadd.f32 %v110, %v111
  %v113 = vadd.f32 %v112, 0.0
  %v114 = vld [vmem:[%s2] sm:$0x1]
  %v115 = vadd.f32 %v114, %v93
  %116 = vst [vmem:[%s2] sm:$0x1] %v115
  %s117 = scalar_lea.vmem %s2, 1
  %v118 = vld [vmem:[%s117] sm:$0x1]
  %v119 = vadd.f32 %v118, %v103
  %120 = vst [vmem:[%s117] sm:$0x1] %v119
  %s121 = scalar_lea.vmem %s2, 2
  %v122 = vld [vmem:[%s121] sm:$0x1]
  %v123 = vadd.f32 %v122, %v113
  %124 = vst [vmem:[%s121] sm:$0x1] %v123
  // Predicated region
  $region14: #{combined_loss.1} parent=0 // pred_check
    _
  $region15: #{combined_loss.1} parent=0 // pred_check_branch
    %126 = sbr.rel (0) target = $region17
  $region16: #{combined_loss.1} parent=0 // pred_region
    _
  $region17: #{combined_loss.1} parent=0 // pred_fallthru
    _
  // Predicated region
  $region18: #{combined_loss.1} parent=0 // pred_check
    _
  $region19: #{combined_loss.1} parent=0 // pred_check_branch
    %128 = sbr.rel (0) target = $region21
  $region20: #{combined_loss.1} parent=0 // pred_region
    _
  $region21: #{combined_loss.1} parent=0 // pred_fallthru
    _

</llo_original>
